<compile_context>
chip_gen: v7x
topology: tpu7x:2x2x1
jax: 0.10.0
libtpu: 0.0.40
codegen_flags: <defaults>
</compile_context>

<pallas_src>
import math

import jax
import jax.numpy as jnp
from jax.experimental import pallas as pl
from jax.experimental.pallas import tpu as pltpu


def make_pe_table(d_model: int, max_len: int = 5000, dtype=jnp.float32) -> jnp.ndarray:
    """Replicates PositionalEncoding.__init__ buffer `pe`, shape (max_len, 1, d_model)."""
    assert d_model % 2 == 0, "PositionalEncoding requires even d_model (as in the PyTorch reference)"
    position = jnp.arange(max_len, dtype=jnp.float32)[:, None]                 # (max_len, 1)
    div_term = jnp.exp(
        jnp.arange(0, d_model, 2, dtype=jnp.float32) * (-math.log(10000.0) / d_model)
    )                                                                           # (d_model//2,)
    angles = position * div_term                                                # (max_len, d_model//2)
    pe = jnp.zeros((max_len, d_model), dtype=jnp.float32)
    pe = pe.at[:, 0::2].set(jnp.sin(angles))
    pe = pe.at[:, 1::2].set(jnp.cos(angles))
    return pe[:, None, :].astype(dtype)                                         # (max_len, 1, d_model)


def _pos_enc_kernel(x_ref, pe_ref, o_ref):
    # x/o: (ts, B, D) [or (ts, D) for B == 1]; pe: (ts, 1, D) [or (ts, D)].
    # Broadcast pe over the batch axis; promote to the output dtype in-register.
    o_ref[...] = x_ref[...].astype(o_ref.dtype) + pe_ref[...].astype(o_ref.dtype)


# ----------------------------- tiling helpers ---------------------------------------


def _pad(n: int, m: int) -> int:
    return -(-n // m) * m


def _sublane(dtype) -> int:
    # Native sublane packing granularity: f32 -> 8, bf16 -> 16, int8/fp8 -> 32.
    return max(8, 32 // jnp.dtype(dtype).itemsize)


def _padded_row_bytes_3d(b: int, d: int, dtype) -> int:
    """VMEM bytes one sequence row of a (ts, b, d) block occupies (minor dims padded
    to the native (sublane, 128-lane) tile)."""
    item = jnp.dtype(dtype).itemsize
    return _pad(b, _sublane(dtype)) * _pad(d, 128) * item


def _padded_row_bytes_2d(d: int, dtype) -> int:
    return _pad(d, 128) * jnp.dtype(dtype).itemsize


def _vmem_capacity_bytes(default: int = 0) -> int:
    try:
        return int(getattr(pltpu.get_tpu_info(), "vmem_capacity_bytes", default))
    except Exception:  # conservative fallback (treated as "small VMEM" chip)
        return default


def _choose_seq_tile(S: int, bytes_per_row: int, per_step_budget: int, align: int) -> int:
    """Sequence rows per grid step. Tail blocks are masked (grid = cdiv(S, ts))."""
    total = S * bytes_per_row
    if total <= per_step_budget:
        # One block would fit; still split in two when the work is large enough to
        # amortize the extra grid step (lets v7x's two TensorCores each take half).
        if total >= (2 << 20) and S >= 2 * align:
            return min(S, _pad(-(-S // 2), align))
        return S
    ts = max(align, (per_step_budget // bytes_per_row) // align * align)
    steps = -(-S // ts)
    if steps % 2 == 1:
        # Prefer an even step count (v7x: 2 TCs) if a small shrink of ts achieves it.
        t = ts - align
        floor_t = max(align, (ts * 3) // 4)
        while t >= floor_t:
            if (-(-S // t)) % 2 == 0:
                return t
            t -= align
    return ts


# ------------------------------- forward --------------------------------------------


def positional_encoding_forward(
    x: jnp.ndarray,
    pe: jnp.ndarray,
    *,
    min_pallas_bytes: int = 1 << 20,
    force_pallas: bool = False,
    donate_x: bool = False,
) -> jnp.ndarray:
    """out = x + pe[:S]  (dropout = identity / eval mode).

    x: (S, B, D); pe: (max_len, 1, D) with max_len >= S.  Result dtype follows
    NumPy/PyTorch promotion (bf16 x + f32 pe -> f32).
    """
    S, B, D = x.shape
    assert pe.ndim == 3 and pe.shape[1] == 1 and pe.shape[2] == D and pe.shape[0] >= S
    out_dtype = jnp.result_type(x.dtype, pe.dtype)

    # Tiny inputs: pallas_call fixed overhead dwarfs a few-KiB add -> let XLA fuse it.
    if not force_pallas and x.size * jnp.dtype(x.dtype).itemsize < min_pallas_bytes:
        return (x + pe[:S]).astype(out_dtype)

    # Per-generation VMEM budget: 128-MiB-VMEM chips (v5e/v6e) get 8 MiB-class blocks
    # under a 64 MiB limit; v7x (64 MiB physical) gets 4 MiB-class blocks under 32 MiB.
    cap = _vmem_capacity_bytes()
    vmem_limit = (64 << 20) if cap >= (96 << 20) else (32 << 20)
    per_step_budget = vmem_limit // 3  # ~2 x (x + out + pe) double-buffered fits the limit

    if B == 1:
        # Free squeeze: sequence rows fill sublanes instead of padding a batch=1 dim 8x.
        x_in = x.reshape(S, D)
        pe_in = pe[:, 0, :]                                   # (max_len, D), contiguous squeeze
        row_bytes = (_padded_row_bytes_2d(D, x.dtype)
                     + _padded_row_bytes_2d(D, out_dtype)
                     + _padded_row_bytes_2d(D, pe.dtype))
        align = max(_sublane(x.dtype), _sublane(out_dtype), _sublane(pe.dtype))
        ts = _choose_seq_tile(S, row_bytes, per_step_budget, align)
        in_specs = [pl.BlockSpec((ts, D), lambda i: (i, 0)),
                    pl.BlockSpec((ts, D), lambda i: (i, 0))]
        out_spec = pl.BlockSpec((ts, D), lambda i: (i, 0))
        out_shape = jax.ShapeDtypeStruct((S, D), out_dtype)
        io_aliases = {}
    else:
        # Natural (S, B, D) layout, no transposes: last two block dims are full extents,
        # so the (8, 128) rule holds for any B/D; pe broadcasts over batch in-kernel.
        x_in, pe_in = x, pe
        row_bytes = (_padded_row_bytes_3d(B, D, x.dtype)
                     + _padded_row_bytes_3d(B, D, out_dtype)
                     + _padded_row_bytes_3d(1, D, pe.dtype))
        ts = _choose_seq_tile(S, row_bytes, per_step_budget, align=8)
        in_specs = [pl.BlockSpec((ts, B, D), lambda i: (i, 0, 0)),
                    pl.BlockSpec((ts, 1, D), lambda i: (i, 0, 0))]
        out_spec = pl.BlockSpec((ts, B, D), lambda i: (i, 0, 0))
        out_shape = jax.ShapeDtypeStruct((S, B, D), out_dtype)
        # Alias only when the caller explicitly donates x (otherwise XLA inserts a
        # defensive copy and the saving evaporates) and dtypes match.
        io_aliases = {0: 0} if (donate_x and x.dtype == out_dtype) else {}

    out = pl.pallas_call(
        _pos_enc_kernel,
        out_shape=out_shape,
        grid=(pl.cdiv(S, ts),),
        in_specs=in_specs,
        out_specs=out_spec,
        input_output_aliases=io_aliases,
        compiler_params=pltpu.CompilerParams(
            dimension_semantics=("parallel",),
            vmem_limit_bytes=vmem_limit,
        ),
    )(x_in, pe_in)

    return out.reshape(S, B, D) if B == 1 else out


if __name__ == "__main__":
    key = jax.random.PRNGKey(0)
    k1, k2, k3, k4 = jax.random.split(key, 4)

    # Case 1: small module-like shapes (seq=8, batch=2, d_model=32), f32.
    S, B, D = 8, 2, 32
    x = jax.random.normal(k1, (S, B, D), dtype=jnp.float32)
    pe = make_pe_table(D, max_len=64)
    out = jax.block_until_ready(positional_encoding_forward(x, pe, force_pallas=True))
    ref = x + pe[:S]
    assert out.shape == (S, B, D) and out.dtype == jnp.float32
    assert jnp.allclose(out, ref, atol=1e-6), "case 1: mismatch vs reference"

    # Case 2: bf16 x + f32 pe promotes to f32 (PyTorch parity); non-128 D, odd B.
    S2, B2, D2 = 12, 3, 40
    x2 = jax.random.normal(k2, (S2, B2, D2), dtype=jnp.bfloat16)
    pe2 = make_pe_table(D2, max_len=32)
    out2 = jax.block_until_ready(positional_encoding_forward(x2, pe2, force_pallas=True))
    ref2 = x2.astype(jnp.float32) + pe2[:S2]
    assert out2.shape == (S2, B2, D2) and out2.dtype == jnp.float32
    assert jnp.allclose(out2, ref2, atol=1e-6), "case 2: mismatch vs reference"

    # Case 3: batch=1 fast layout (sequence on sublanes, no 8x batch padding).
    S3, B3, D3 = 16, 1, 32
    x3 = jax.random.normal(k3, (S3, B3, D3), dtype=jnp.float32)
    pe3 = make_pe_table(D3, max_len=64)
    out3 = jax.block_until_ready(positional_encoding_forward(x3, pe3, force_pallas=True))
    ref3 = x3 + pe3[:S3]
    assert out3.shape == (S3, B3, D3)
    assert jnp.allclose(out3, ref3, atol=1e-6), "case 3: mismatch vs reference"

    # Case 4: larger shape exercising the multi-step grid with a masked tail block.
    S4, B4, D4 = 270, 8, 128
    x4 = jax.random.normal(k4, (S4, B4, D4), dtype=jnp.float32)
    pe4 = make_pe_table(D4, max_len=512)
    out4 = jax.block_until_ready(positional_encoding_forward(x4, pe4))
    ref4 = x4 + pe4[:S4]
    assert out4.shape == (S4, B4, D4)
    assert jnp.allclose(out4, ref4, atol=1e-6), "case 4: mismatch vs reference"

    print("KERNEL_OK")
</pallas_src>

<mosaic_0001>
module attributes {stable_mosaic.version = 11 : i64} {
  func.func @_pos_enc_kernel(%arg0: i32, %arg1: memref<8x2x32xf32, #tpu.memory_space<vmem>>, %arg2: memref<8x1x32xf32, #tpu.memory_space<vmem>>, %arg3: memref<8x2x32xf32, #tpu.memory_space<vmem>>) attributes {dimension_semantics = [#tpu.dimension_semantics<parallel>], iteration_bounds = array<i64: 1>, scalar_prefetch = 0 : i64, scratch_operands = 0 : i64, tpu.core_type = #tpu.core_type<tc>, window_params = [{transform_indices = @transform_0, window_bounds = array<i64: 8, 2, 32>}, {transform_indices = @transform_1, window_bounds = array<i64: 8, 1, 32>}, {transform_indices = @transform_2, window_bounds = array<i64: 8, 2, 32>}]} {
    %c0 = arith.constant 0 : index
    %c0_0 = arith.constant 0 : index
    %c0_1 = arith.constant 0 : index
    %0 = vector.load %arg1[%c0, %c0_0, %c0_1] : memref<8x2x32xf32, #tpu.memory_space<vmem>>, vector<8x2x32xf32>
    %c0_2 = arith.constant 0 : index
    %c0_3 = arith.constant 0 : index
    %c0_4 = arith.constant 0 : index
    %1 = vector.load %arg2[%c0_2, %c0_3, %c0_4] : memref<8x1x32xf32, #tpu.memory_space<vmem>>, vector<8x1x32xf32>
    %2 = vector.broadcast %1 : vector<8x1x32xf32> to vector<8x2x32xf32>
    %3 = arith.addf %0, %2 : vector<8x2x32xf32>
    %c0_5 = arith.constant 0 : index
    %c0_6 = arith.constant 0 : index
    %c0_7 = arith.constant 0 : index
    %4 = vector.load %arg3[%c0_5, %c0_6, %c0_7] : memref<8x2x32xf32, #tpu.memory_space<vmem>>, vector<8x2x32xf32>
    tpu.vector_store %arg3[%c0_5, %c0_6, %c0_7], %3 {strides = array<i32>} : memref<8x2x32xf32, #tpu.memory_space<vmem>>, vector<8x2x32xf32>,
    return
  }
  func.func @transform_0(%arg0: i32) -> (i32, i32, i32) {
    %c0_i32 = arith.constant 0 : i32
    %c0_i32_0 = arith.constant 0 : i32
    %c0_i32_1 = arith.constant 0 : i32
    return %arg0, %c0_i32, %c0_i32_0 : i32, i32, i32
  }
  func.func @transform_1(%arg0: i32) -> (i32, i32, i32) {
    %c0_i32 = arith.constant 0 : i32
    %c0_i32_0 = arith.constant 0 : i32
    %c0_i32_1 = arith.constant 0 : i32
    return %arg0, %c0_i32, %c0_i32_0 : i32, i32, i32
  }
  func.func @transform_2(%arg0: i32) -> (i32, i32, i32) {
    %c0_i32 = arith.constant 0 : i32
    %c0_i32_0 = arith.constant 0 : i32
    %c0_i32_1 = arith.constant 0 : i32
    return %arg0, %c0_i32, %c0_i32_0 : i32, i32, i32
  }
}

</mosaic_0001>

<llo_original>
// kernel: tpu_custom_call.1
$region0: #{tpu_custom_call.1}
  #allocation0 [shape = 'u32[]', space=smem, size = 0x4, offset = 0x4, fixed_abs, tag = 'smem constant byte address 0x4 - core index']
  #allocation1 [shape = 'u32[144,128]{1,0:T(1,128)}', space=vmem, size = 0x12000, scoped, tag = 'internal scratch']
  %s0 = inlined_call_operand.vmem [shape: f32[8,2,32], index: 0, kind: input, shape index: {}]
  %s1 = inlined_call_operand.vmem [shape: f32[64,1,32], index: 1, kind: input, shape index: {}]
  %s2 = inlined_call_operand.hbm [shape: f32[8,2,32], index: 2, kind: output, shape index: {}]
  %s3 = sld [smem:[#allocation0]]
  $region18: #{tpu_custom_call.1} parent=0
    _
  %s5 = ssub.s32 1, %s3
  %s6 = scalar_select 0, %s5, %s3
  $region1: #{tpu_custom_call.1} parent=0
    #allocation2 [shape = 'u8[8192]{0}', space=vmem, size = 0x2000, scoped, tag = 'output window, operand 0, single buffered']
    #allocation3 [shape = 's32[1]{0}', space=sflag, size = 0x4, scoped, tag = 'scoped memory for tpu_custom_call.1']
    %7 = vsyncpa [#allocation3], 0
    // Predicated region
    $region2: #{tpu_custom_call.1} parent=1 // pred_check
      _
    $region3: #{tpu_custom_call.1} parent=1 // pred_check_branch
      %9 = sbr.rel (0) target = $region5
    $region4: #{tpu_custom_call.1} parent=1 // pred_region
      _
    $region5: #{tpu_custom_call.1} parent=1 // pred_fallthru
      _
    // Predicated region
    $region6: #{tpu_custom_call.1} parent=1 // pred_check
      _
    $region7: #{tpu_custom_call.1} parent=1 // pred_check_branch
      %11 = sbr.rel (0) target = $region9
    $region8: #{tpu_custom_call.1} parent=1 // pred_region
      _
    $region9: #{tpu_custom_call.1} parent=1 // pred_fallthru
      _
    %v12 = vld [vmem:[%s0] sm:$0x3]
    %v13 = vld [vmem:[%s0 + $0x2] sm:$0x3]
    %v14 = vld [vmem:[%s0 + $0x4] sm:$0x3]
    %v15 = vld [vmem:[%s0 + $0x6] sm:$0x3]
    %v16 = vld [vmem:[%s0 + $0x8] sm:$0x3]
    %v17 = vld [vmem:[%s0 + $0xa] sm:$0x3]
    %v18 = vld [vmem:[%s0 + $0xc] sm:$0x3]
    %v19 = vld [vmem:[%s0 + $0xe] sm:$0x3]
    %v20 = vld [vmem:[%s1] sm:$0x1]
    %v21 = vld [vmem:[%s1 + $0x1] sm:$0x1]
    %v22 = vld [vmem:[%s1 + $0x2] sm:$0x1]
    %v23 = vld [vmem:[%s1 + $0x3] sm:$0x1]
    %v24 = vld [vmem:[%s1 + $0x4] sm:$0x1]
    %v25 = vld [vmem:[%s1 + $0x5] sm:$0x1]
    %v26 = vld [vmem:[%s1 + $0x6] sm:$0x1]
    %v27 = vld [vmem:[%s1 + $0x7] sm:$0x1]
    %v36 = vlaneseq
    %v37 = vshrl.u32 %v36, 7
    %v38 = vsub.s32 0, %v37
    %v39 = vrot.slane %v20, %v38
    %v40 = vlaneseq
    %v41 = vshrl.u32 %v40, 7
    %v42 = vsub.s32 0, %v41
    %v43 = vrot.slane %v21, %v42
    %v44 = vlaneseq
    %v45 = vshrl.u32 %v44, 7
    %v46 = vsub.s32 0, %v45
    %v47 = vrot.slane %v22, %v46
    %v48 = vlaneseq
    %v49 = vshrl.u32 %v48, 7
    %v50 = vsub.s32 0, %v49
    %v51 = vrot.slane %v23, %v50
    %v52 = vlaneseq
    %v53 = vshrl.u32 %v52, 7
    %v54 = vsub.s32 0, %v53
    %v55 = vrot.slane %v24, %v54
    %v56 = vlaneseq
    %v57 = vshrl.u32 %v56, 7
    %v58 = vsub.s32 0, %v57
    %v59 = vrot.slane %v25, %v58
    %v60 = vlaneseq
    %v61 = vshrl.u32 %v60, 7
    %v62 = vsub.s32 0, %v61
    %v63 = vrot.slane %v26, %v62
    %v64 = vlaneseq
    %v65 = vshrl.u32 %v64, 7
    %v66 = vsub.s32 0, %v65
    %v67 = vrot.slane %v27, %v66
    %v76 = vadd.f32 %v12, %v39
    %v77 = vadd.f32 %v13, %v43
    %v78 = vadd.f32 %v14, %v47
    %v79 = vadd.f32 %v15, %v51
    %v80 = vadd.f32 %v16, %v55
    %v81 = vadd.f32 %v17, %v59
    %v82 = vadd.f32 %v18, %v63
    %v83 = vadd.f32 %v19, %v67
    %vm84 = vcmask 254976
    %85 = vst.msk [vmem:[#allocation2] sm:$0x3] %vm84, %v76
    %86 = vst.msk [vmem:[#allocation2 + $0x2] sm:$0x3] %vm84, %v77
    %87 = vst.msk [vmem:[#allocation2 + $0x4] sm:$0x3] %vm84, %v78
    %88 = vst.msk [vmem:[#allocation2 + $0x6] sm:$0x3] %vm84, %v79
    %89 = vst.msk [vmem:[#allocation2 + $0x8] sm:$0x3] %vm84, %v80
    %90 = vst.msk [vmem:[#allocation2 + $0xa] sm:$0x3] %vm84, %v81
    %91 = vst.msk [vmem:[#allocation2 + $0xc] sm:$0x3] %vm84, %v82
    %92 = vst.msk [vmem:[#allocation2 + $0xe] sm:$0x3] %vm84, %v83
    // Predicated region
    $region10: #{tpu_custom_call.1} parent=1 // pred_check
      _
    $region11: #{tpu_custom_call.1} parent=1 // pred_check_branch
      %94 = sbr.rel (0) target = $region13
    $region12: #{tpu_custom_call.1} parent=1 // pred_region
      %s96 = ssub.s32 256, 256
      %97 = vsyncadd [#allocation3], %s96
      %s98 = sshll.u32 [#allocation2], 4
      %s99 = int_to_ptr.vmem [resolvable:$true] %s98
      %104 = dma.vmem_to_hbm [thread:$0]  %s99, 256, %s2, [#allocation3], 32, 32, 2
    $region13: #{tpu_custom_call.1} parent=1 // pred_fallthru
      _
    // Predicated region
    $region14: #{tpu_custom_call.1} parent=1 // pred_check
      _
    $region15: #{tpu_custom_call.1} parent=1 // pred_check_branch
      %106 = sbr.rel (0) target = $region17
    $region16: #{tpu_custom_call.1} parent=1 // pred_region
      %107 = dma.done [#allocation3], 256
    $region17: #{tpu_custom_call.1} parent=1 // pred_fallthru
      _
    %108 = vsyncpa [#allocation3], 1

</llo_original>
